<compile_context>
chip_gen: v6e
topology: v6e:2x2x1
jax: 0.10.0
libtpu: 0.0.40
codegen_flags: <defaults>
</compile_context>

<pallas_src>
import jax
import jax.numpy as jnp
from jax.experimental import pallas as pl
from jax.experimental.pallas import tpu as pltpu


def mlp_kernel(x_ref, w1_ref, b1_ref, w2_ref, b2_ref, w3_ref, b3_ref, o_ref):
    # Everything f32: the kernel is HBM-bound, the MXU has huge slack at these
    # shapes, and skipping bf16 casts removes two full-tile VPU passes (v5e has
    # no bf16 VPU) and keeps full f32 accuracy.
    x = x_ref[...]                                                    # (tb, Din) f32

    h1 = jnp.dot(x, w1_ref[...], preferred_element_type=jnp.float32) + b1_ref[...]
    h1 = jnp.maximum(h1, 0.0)

    h2 = jnp.dot(h1, w2_ref[...], preferred_element_type=jnp.float32) + b2_ref[...]
    h2 = jnp.maximum(h2, 0.0)

    z = jnp.dot(h2, w3_ref[...], preferred_element_type=jnp.float32) + b3_ref[...]

    # Dropout (p=0.2) -> identity in eval mode.
    # TODO(synk): training-mode dropout (pltpu.prng_seed + stateful_bernoulli
    #             + 1/(1-p) scaling) not wired in.
    # Sigmoid = 1 / (1 + exp(-z)): exp and approximate reciprocal both run on
    # the EUP slot (free relative to a VALU divide).
    o_ref[...] = pl.reciprocal(1.0 + jnp.exp(-z), approx=True).astype(o_ref.dtype)


def _round_up(n, m):
    return ((n + m - 1) // m) * m


def _pick_batch_tile(B, Din, Dout, in_bytes, out_bytes):
    """Pick the batch tile.

    Goals:
      * large tile (amortize ~0.35 us per-grid-step overhead),
      * >=4 grid steps for large B (v7x: 2 TensorCores x double buffering,
        so each core keeps >=2 steps to pipeline),
      * double-buffered x/out tiles + f32 intermediates stay well under the
        scoped-VMEM defaults (16/32/32 MiB on v5e/v6e/v7x; v7x has only
        64 MiB physical per core).
    """
    if B <= 32:
        return B  # single tile; block == full array dim, no (8,128) issue
    # per-row VMEM bytes: 2x-buffered x + out tiles, plus f32 h1 (64) / h2 (32)
    row_bytes = 2 * (Din * in_bytes + Dout * out_bytes) + (64 + 32) * 4
    vmem_budget = 10 * 1024 * 1024
    tb_vmem = max(8, (vmem_budget // row_bytes) // 8 * 8)
    tb_steps = _round_up(pl.cdiv(B, 4), 8)          # >= 4 grid steps when possible
    return max(8, min(8192, tb_vmem, tb_steps))


def linear_model_forward(x, params, *, out_dtype=None, tb=None):
    """x: (B, input_dim). params: dict of w1,b1,w2,b2,w3,b3 (w as (in, out)).

    out_dtype: output dtype (default x.dtype). Pass jnp.bfloat16 to halve the
    output HBM writeback if downstream tolerates it.
    """
    B, Din = x.shape
    H1 = params["w1"].shape[1]
    H2 = params["w2"].shape[1]
    Dout = params["w3"].shape[1]
    out_dtype = x.dtype if out_dtype is None else jnp.dtype(out_dtype)

    # NOTE: x is fed to the kernel in its original dtype — a wrapper-side cast
    # would be a separate XLA op with its own HBM round trip (strictly more
    # traffic than reading f32 directly in-kernel).
    w1 = params["w1"].astype(jnp.float32)
    w2 = params["w2"].astype(jnp.float32)
    w3 = params["w3"].astype(jnp.float32)
    b1 = params["b1"].astype(jnp.float32).reshape(1, H1)
    b2 = params["b2"].astype(jnp.float32).reshape(1, H2)
    b3 = params["b3"].astype(jnp.float32).reshape(1, Dout)

    if tb is None:
        tb = _pick_batch_tile(B, Din, Dout, x.dtype.itemsize, out_dtype.itemsize)
    grid = (pl.cdiv(B, tb),)  # remainder tile handled by Pallas boundary padding

    full = lambda i: (0, 0)  # weights/biases resident across the grid (~tens of KB)

    flops = 2 * B * (Din * H1 + H1 * H2 + H2 * Dout)
    bytes_accessed = (
        x.size * x.dtype.itemsize
        + sum(int(a.size) * 4 for a in (w1, b1, w2, b2, w3, b3))
        + B * Dout * out_dtype.itemsize
    )
    cost = pl.CostEstimate(
        flops=flops,
        transcendentals=B * Dout,          # exp in the sigmoid epilogue
        bytes_accessed=bytes_accessed,
    )

    return pl.pallas_call(
        mlp_kernel,
        out_shape=jax.ShapeDtypeStruct((B, Dout), out_dtype),
        grid_spec=pltpu.PrefetchScalarGridSpec(
            num_scalar_prefetch=0,
            grid=grid,
            in_specs=[
                pl.BlockSpec((tb, Din), lambda i: (i, 0)),   # x tile (pipelined)
                pl.BlockSpec((Din, H1), full),               # w1
                pl.BlockSpec((1, H1), full),                 # b1
                pl.BlockSpec((H1, H2), full),                # w2
                pl.BlockSpec((1, H2), full),                 # b2
                pl.BlockSpec((H2, Dout), full),              # w3
                pl.BlockSpec((1, Dout), full),               # b3
            ],
            out_specs=pl.BlockSpec((tb, Dout), lambda i: (i, 0)),
        ),
        compiler_params=pltpu.CompilerParams(
            dimension_semantics=("parallel",),
        ),
        cost_estimate=cost,
        # TODO(synk): lane-dense (B//8, 8*Dout) output slab would remove the
        # masked vst.msk partial stores (Dout < 128 lanes), but needs an
        # in-kernel sublane->lane reshape; skipped to keep Mosaic lowering
        # robust across generations.
    )(x, w1, b1, w2, b2, w3, b3)


def init_params(key, input_dim, out_dim):
    """Deterministic init mirroring nn.Linear default (uniform +/- 1/sqrt(fan_in)).
    Weights stored as (in_features, out_features)."""
    dims = [(input_dim, 64), (64, 32), (32, out_dim)]
    params = {}
    keys = jax.random.split(key, 2 * len(dims))
    for n, (fan_in, fan_out) in enumerate(dims):
        bound = 1.0 / (fan_in ** 0.5)
        w = jax.random.uniform(keys[2 * n], (fan_in, fan_out),
                               minval=-bound, maxval=bound, dtype=jnp.float32)
        b = jax.random.uniform(keys[2 * n + 1], (1, fan_out),
                               minval=-bound, maxval=bound, dtype=jnp.float32)
        params[f"w{n + 1}"] = w
        params[f"b{n + 1}"] = b
    return params


if __name__ == "__main__":
    key = jax.random.PRNGKey(0)
    k_x, k_p = jax.random.split(key)

    B, INPUT_DIM, OUT_DIM = 8, 32, 16
    x = jax.random.normal(k_x, (B, INPUT_DIM), dtype=jnp.float32)
    params = init_params(k_p, INPUT_DIM, OUT_DIM)

    out = linear_model_forward(x, params)
    jax.block_until_ready(out)

    # Pure-JAX f32 reference (dropout = identity in eval mode).
    h1 = jnp.maximum(x @ params["w1"] + params["b1"], 0.0)
    h2 = jnp.maximum(h1 @ params["w2"] + params["b2"], 0.0)
    ref = jax.nn.sigmoid(h2 @ params["w3"] + params["b3"])

    assert out.shape == (B, OUT_DIM)
    assert jnp.allclose(out, ref, atol=5e-3, rtol=5e-3), \
        float(jnp.max(jnp.abs(out - ref)))

    print("KERNEL_OK")
</pallas_src>

<mosaic_0001>
module attributes {stable_mosaic.version = 11 : i64} {
  func.func @mlp_kernel(%arg0: i32, %arg1: memref<8x32xf32, #tpu.memory_space<vmem>>, %arg2: memref<32x64xf32, #tpu.memory_space<vmem>>, %arg3: memref<1x64xf32, #tpu.memory_space<vmem>>, %arg4: memref<64x32xf32, #tpu.memory_space<vmem>>, %arg5: memref<1x32xf32, #tpu.memory_space<vmem>>, %arg6: memref<32x16xf32, #tpu.memory_space<vmem>>, %arg7: memref<1x16xf32, #tpu.memory_space<vmem>>, %arg8: memref<8x16xf32, #tpu.memory_space<vmem>>) attributes {dimension_semantics = [#tpu.dimension_semantics<parallel>], iteration_bounds = array<i64: 1>, scalar_prefetch = 0 : i64, scratch_operands = 0 : i64, tpu.core_type = #tpu.core_type<tc>, window_params = [{transform_indices = @transform_0, window_bounds = array<i64: 8, 32>}, {pipeline_mode = #tpu.pipeline_mode<synchronous>, transform_indices = @transform_1, window_bounds = array<i64: 32, 64>}, {pipeline_mode = #tpu.pipeline_mode<synchronous>, transform_indices = @transform_2, window_bounds = array<i64: 1, 64>}, {pipeline_mode = #tpu.pipeline_mode<synchronous>, transform_indices = @transform_3, window_bounds = array<i64: 64, 32>}, {pipeline_mode = #tpu.pipeline_mode<synchronous>, transform_indices = @transform_4, window_bounds = array<i64: 1, 32>}, {pipeline_mode = #tpu.pipeline_mode<synchronous>, transform_indices = @transform_5, window_bounds = array<i64: 32, 16>}, {pipeline_mode = #tpu.pipeline_mode<synchronous>, transform_indices = @transform_6, window_bounds = array<i64: 1, 16>}, {transform_indices = @transform_7, window_bounds = array<i64: 8, 16>}]} {
    %c0 = arith.constant 0 : index
    %c0_0 = arith.constant 0 : index
    %0 = vector.load %arg1[%c0, %c0_0] : memref<8x32xf32, #tpu.memory_space<vmem>>, vector<8x32xf32>
    %c0_1 = arith.constant 0 : index
    %c0_2 = arith.constant 0 : index
    %1 = vector.load %arg2[%c0_1, %c0_2] : memref<32x64xf32, #tpu.memory_space<vmem>>, vector<32x64xf32>
    %cst = arith.constant dense<0.000000e+00> : vector<8x64xf32>
    %2 = tpu.matmul %0, %1, %cst {dimension_numbers = #tpu.dot_dimension_numbers<[1], [0], [0], [1], [0, 0, 1, 1], [], []>} : vector<8x32xf32>, vector<32x64xf32>, vector<8x64xf32> -> vector<8x64xf32>
    %c0_3 = arith.constant 0 : index
    %c0_4 = arith.constant 0 : index
    %3 = vector.load %arg3[%c0_3, %c0_4] : memref<1x64xf32, #tpu.memory_space<vmem>>, vector<1x64xf32>
    %4 = vector.broadcast %3 : vector<1x64xf32> to vector<8x64xf32>
    %5 = arith.addf %2, %4 : vector<8x64xf32>
    %cst_5 = arith.constant 0.000000e+00 : f32
    %6 = vector.broadcast %cst_5 : f32 to vector<8x64xf32>
    %7 = arith.maximumf %5, %6 : vector<8x64xf32>
    %c0_6 = arith.constant 0 : index
    %c0_7 = arith.constant 0 : index
    %8 = vector.load %arg4[%c0_6, %c0_7] : memref<64x32xf32, #tpu.memory_space<vmem>>, vector<64x32xf32>
    %cst_8 = arith.constant dense<0.000000e+00> : vector<8x32xf32>
    %9 = tpu.matmul %7, %8, %cst_8 {dimension_numbers = #tpu.dot_dimension_numbers<[1], [0], [0], [1], [0, 0, 1, 1], [], []>} : vector<8x64xf32>, vector<64x32xf32>, vector<8x32xf32> -> vector<8x32xf32>
    %c0_9 = arith.constant 0 : index
    %c0_10 = arith.constant 0 : index
    %10 = vector.load %arg5[%c0_9, %c0_10] : memref<1x32xf32, #tpu.memory_space<vmem>>, vector<1x32xf32>
    %11 = vector.broadcast %10 : vector<1x32xf32> to vector<8x32xf32>
    %12 = arith.addf %9, %11 : vector<8x32xf32>
    %cst_11 = arith.constant 0.000000e+00 : f32
    %13 = vector.broadcast %cst_11 : f32 to vector<8x32xf32>
    %14 = arith.maximumf %12, %13 : vector<8x32xf32>
    %c0_12 = arith.constant 0 : index
    %c0_13 = arith.constant 0 : index
    %15 = vector.load %arg6[%c0_12, %c0_13] : memref<32x16xf32, #tpu.memory_space<vmem>>, vector<32x16xf32>
    %cst_14 = arith.constant dense<0.000000e+00> : vector<8x16xf32>
    %16 = tpu.matmul %14, %15, %cst_14 {dimension_numbers = #tpu.dot_dimension_numbers<[1], [0], [0], [1], [0, 0, 1, 1], [], []>} : vector<8x32xf32>, vector<32x16xf32>, vector<8x16xf32> -> vector<8x16xf32>
    %c0_15 = arith.constant 0 : index
    %c0_16 = arith.constant 0 : index
    %17 = vector.load %arg7[%c0_15, %c0_16] : memref<1x16xf32, #tpu.memory_space<vmem>>, vector<1x16xf32>
    %18 = vector.broadcast %17 : vector<1x16xf32> to vector<8x16xf32>
    %19 = arith.addf %16, %18 : vector<8x16xf32>
    %cst_17 = arith.constant 0.000000e+00 : f32
    %20 = vector.broadcast %cst_17 : f32 to vector<8x16xf32>
    %21 = arith.subf %20, %19 : vector<8x16xf32>
    %22 = math.exp %21 : vector<8x16xf32>
    %cst_18 = arith.constant 1.000000e+00 : f32
    %23 = vector.broadcast %cst_18 : f32 to vector<8x16xf32>
    %24 = arith.addf %23, %22 : vector<8x16xf32>
    %25 = tpu.reciprocal %24 {approx = true} : vector<8x16xf32> -> vector<8x16xf32>
    %c0_19 = arith.constant 0 : index
    %c0_20 = arith.constant 0 : index
    %26 = vector.load %arg8[%c0_19, %c0_20] : memref<8x16xf32, #tpu.memory_space<vmem>>, vector<8x16xf32>
    tpu.vector_store %arg8[%c0_19, %c0_20], %25 {strides = array<i32>} : memref<8x16xf32, #tpu.memory_space<vmem>>, vector<8x16xf32>,
    return
  }
  func.func @transform_0(%arg0: i32) -> (i32, i32) {
    %c0_i32 = arith.constant 0 : i32
    %c0_i32_0 = arith.constant 0 : i32
    return %arg0, %c0_i32 : i32, i32
  }
  func.func @transform_1(%arg0: i32) -> (i32, i32) {
    %c0_i32 = arith.constant 0 : i32
    %c0_i32_0 = arith.constant 0 : i32
    %c0_i32_1 = arith.constant 0 : i32
    return %c0_i32, %c0_i32_0 : i32, i32
  }
  func.func @transform_2(%arg0: i32) -> (i32, i32) {
    %c0_i32 = arith.constant 0 : i32
    %c0_i32_0 = arith.constant 0 : i32
    %c0_i32_1 = arith.constant 0 : i32
    return %c0_i32, %c0_i32_0 : i32, i32
  }
  func.func @transform_3(%arg0: i32) -> (i32, i32) {
    %c0_i32 = arith.constant 0 : i32
    %c0_i32_0 = arith.constant 0 : i32
    %c0_i32_1 = arith.constant 0 : i32
    return %c0_i32, %c0_i32_0 : i32, i32
  }
  func.func @transform_4(%arg0: i32) -> (i32, i32) {
    %c0_i32 = arith.constant 0 : i32
    %c0_i32_0 = arith.constant 0 : i32
    %c0_i32_1 = arith.constant 0 : i32
    return %c0_i32, %c0_i32_0 : i32, i32
  }
  func.func @transform_5(%arg0: i32) -> (i32, i32) {
    %c0_i32 = arith.constant 0 : i32
    %c0_i32_0 = arith.constant 0 : i32
    %c0_i32_1 = arith.constant 0 : i32
    return %c0_i32, %c0_i32_0 : i32, i32
  }
  func.func @transform_6(%arg0: i32) -> (i32, i32) {
    %c0_i32 = arith.constant 0 : i32
    %c0_i32_0 = arith.constant 0 : i32
    %c0_i32_1 = arith.constant 0 : i32
    return %c0_i32, %c0_i32_0 : i32, i32
  }
  func.func @transform_7(%arg0: i32) -> (i32, i32) {
    %c0_i32 = arith.constant 0 : i32
    %c0_i32_0 = arith.constant 0 : i32
    return %arg0, %c0_i32 : i32, i32
  }
}

</mosaic_0001>

<llo_original>
// kernel: tpu_custom_call.1
$region0: #{tpu_custom_call.1}
  #allocation0 [shape = 'u32[]', space=smem, size = 0x4, offset = 0x4, fixed_abs, tag = 'smem constant byte address 0x4 - core index']
  #allocation1 [shape = 'u32[144,128]{1,0:T(1,128)}', space=vmem, size = 0x12000, scoped, tag = 'internal scratch']
  %s0 = inlined_call_operand.vmem [shape: f32[8,32], index: 0, kind: input, shape index: {}]
  %s1 = inlined_call_operand.vmem [shape: f32[32,64], index: 1, kind: input, shape index: {}]
  %s2 = inlined_call_operand.vmem [shape: f32[1,64], index: 2, kind: input, shape index: {}]
  %s3 = inlined_call_operand.vmem [shape: f32[64,32], index: 3, kind: input, shape index: {}]
  %s4 = inlined_call_operand.vmem [shape: f32[1,32], index: 4, kind: input, shape index: {}]
  %s5 = inlined_call_operand.vmem [shape: f32[32,16], index: 5, kind: input, shape index: {}]
  %s6 = inlined_call_operand.vmem [shape: f32[1,16], index: 6, kind: input, shape index: {}]
  %s7 = inlined_call_operand.hbm [shape: f32[8,16], index: 7, kind: output, shape index: {}]
  %s8 = sld [smem:[#allocation0]]
  $region38: #{tpu_custom_call.1} parent=0
    _
  %s10 = ssub.s32 1, %s8
  %s11 = scalar_select 0, %s10, %s8
  $region1: #{tpu_custom_call.1} parent=0
    #allocation2 [shape = 'u8[4096]{0}', space=vmem, size = 0x1000, scoped, tag = 'output window, operand 0, single buffered']
    #allocation3 [shape = 's32[1]{0}', space=sflag, size = 0x4, scoped, tag = 'scoped memory for tpu_custom_call.1']
    %12 = vsyncpa [#allocation3], 0
    // Predicated region
    $region2: #{tpu_custom_call.1} parent=1 // pred_check
      _
    $region3: #{tpu_custom_call.1} parent=1 // pred_check_branch
      %14 = sbr.rel (0) target = $region5
    $region4: #{tpu_custom_call.1} parent=1 // pred_region
      _
    $region5: #{tpu_custom_call.1} parent=1 // pred_fallthru
      _
    // Predicated region
    $region6: #{tpu_custom_call.1} parent=1 // pred_check
      _
    $region7: #{tpu_custom_call.1} parent=1 // pred_check_branch
      %16 = sbr.rel (0) target = $region9
    $region8: #{tpu_custom_call.1} parent=1 // pred_region
      _
    $region9: #{tpu_custom_call.1} parent=1 // pred_fallthru
      _
    // Predicated region
    $region10: #{tpu_custom_call.1} parent=1 // pred_check
      _
    $region11: #{tpu_custom_call.1} parent=1 // pred_check_branch
      %18 = sbr.rel (0) target = $region13
    $region12: #{tpu_custom_call.1} parent=1 // pred_region
      _
    $region13: #{tpu_custom_call.1} parent=1 // pred_fallthru
      _
    // Predicated region
    $region14: #{tpu_custom_call.1} parent=1 // pred_check
      _
    $region15: #{tpu_custom_call.1} parent=1 // pred_check_branch
      %20 = sbr.rel (0) target = $region17
    $region16: #{tpu_custom_call.1} parent=1 // pred_region
      _
    $region17: #{tpu_custom_call.1} parent=1 // pred_fallthru
      _
    // Predicated region
    $region18: #{tpu_custom_call.1} parent=1 // pred_check
      _
    $region19: #{tpu_custom_call.1} parent=1 // pred_check_branch
      %22 = sbr.rel (0) target = $region21
    $region20: #{tpu_custom_call.1} parent=1 // pred_region
      _
    $region21: #{tpu_custom_call.1} parent=1 // pred_fallthru
      _
    // Predicated region
    $region22: #{tpu_custom_call.1} parent=1 // pred_check
      _
    $region23: #{tpu_custom_call.1} parent=1 // pred_check_branch
      %24 = sbr.rel (0) target = $region25
    $region24: #{tpu_custom_call.1} parent=1 // pred_region
      _
    $region25: #{tpu_custom_call.1} parent=1 // pred_fallthru
      _
    // Predicated region
    $region26: #{tpu_custom_call.1} parent=1 // pred_check
      _
    $region27: #{tpu_custom_call.1} parent=1 // pred_check_branch
      %26 = sbr.rel (0) target = $region29
    $region28: #{tpu_custom_call.1} parent=1 // pred_region
      _
    $region29: #{tpu_custom_call.1} parent=1 // pred_fallthru
      _
    %v27 = vld [vmem:[%s0] sm:$0xff]
    %v28 = vld [vmem:[%s1] sm:$0xff]
    %v29 = vld [vmem:[%s1 + $0x8] sm:$0xff]
    %v30 = vld [vmem:[%s1 + $0x10] sm:$0xff]
    %v31 = vld [vmem:[%s1 + $0x18] sm:$0xff]
    %v32 = vld [vmem:[%s2] sm:$0x1]
    %v34 = vlaneseq
    %v35 = vshrl.u32 %v34, 7
    %v36 = vsub.s32 0, %v35
    %v37 = vrot.slane %v32, %v36
    %vm39 = vcmask 261120
    %v41 = vsel %vm39, %v27, 0
    %43 = vmatprep.subr.mxu0 0.0
    %44 = vmatpush1.msra.mxu0 0.0
    %45 = vmatprep.subr.mxu0 0.0
    %46 = vmatpush1.msra.mxu0 0.0
    %47 = vmatprep.subr.mxu0 0.0
    %48 = vmatpush1.msra.mxu0 0.0
    %49 = vmatprep.subr.mxu0 0.0
    %50 = vmatpush1.msra.mxu0 0.0
    %51 = vmatprep.subr.mxu0 0.0
    %52 = vmatpush1.msra.mxu0 0.0
    %53 = vmatprep.subr.mxu0 0.0
    %54 = vmatpush1.msra.mxu0 0.0
    %55 = vmatprep.subr.mxu0 0.0
    %56 = vmatpush1.msra.mxu0 0.0
    %57 = vmatprep.subr.mxu0 0.0
    %58 = vmatpush1.msra.mxu0 0.0
    %59 = vmatprep.subr.mxu0 0.0
    %60 = vmatpush1.msra.mxu0 0.0
    %61 = vmatprep.subr.mxu0 0.0
    %62 = vmatpush1.msra.mxu0 0.0
    %63 = vmatprep.subr.mxu0 0.0
    %64 = vmatpush1.msra.mxu0 0.0
    %65 = vmatprep.subr.mxu0 0.0
    %66 = vmatpush1.msra.mxu0 0.0
    %67 = vmatprep.subr.mxu0 0.0
    %68 = vmatpush1.msra.mxu0 %v31
    %69 = vmatprep.subr.mxu0 0.0
    %70 = vmatpush1.msra.mxu0 %v30
    %71 = vmatprep.subr.mxu0 0.0
    %72 = vmatpush1.msra.mxu0 %v29
    %73 = vmatprep.subr.mxu0 0.0
    %74 = vmatpush1.msra.mxu0 %v28
    %75 = vmatprep.subr.mxu0 0.0
    %76 = vmatpush2.msra.mxu0 0.0
    %77 = vmatprep.subr.mxu0 0.0
    %78 = vmatpush2.msra.mxu0 0.0
    %79 = vmatprep.subr.mxu0 0.0
    %80 = vmatpush2.msra.mxu0 0.0
    %81 = vmatprep.subr.mxu0 0.0
    %82 = vmatpush2.msra.mxu0 0.0
    %83 = vmatprep.subr.mxu0 0.0
    %84 = vmatpush2.msra.mxu0 0.0
    %85 = vmatprep.subr.mxu0 0.0
    %86 = vmatpush2.msra.mxu0 0.0
    %87 = vmatprep.subr.mxu0 0.0
    %88 = vmatpush2.msra.mxu0 0.0
    %89 = vmatprep.subr.mxu0 0.0
    %90 = vmatpush2.msra.mxu0 0.0
    %91 = vmatprep.subr.mxu0 0.0
    %92 = vmatpush2.msra.mxu0 0.0
    %93 = vmatprep.subr.mxu0 0.0
    %94 = vmatpush2.msra.mxu0 0.0
    %95 = vmatprep.subr.mxu0 0.0
    %96 = vmatpush2.msra.mxu0 0.0
    %97 = vmatprep.subr.mxu0 0.0
    %98 = vmatpush2.msra.mxu0 0.0
    %99 = vmatprep.subr.mxu0 0.0
    %100 = vmatpush2.msra.mxu0 0.0
    %101 = vmatprep.subr.mxu0 0.0
    %102 = vmatpush2.msra.mxu0 0.0
    %103 = vmatprep.subr.mxu0 0.0
    %104 = vmatpush2.msra.mxu0 0.0
    %105 = vmatprep.subr.mxu0 0.0
    %106 = vmatpush2.msra.mxu0 0.0
    %107 = vmatprep.mubr.f32.mxu0 0.0
    %108 = vmatmul.mubr.f32.gmra.mxu0 %v41
    %v109 = vpop.f32.mrf.mxu0
    %v110 = vadd.f32 %v37, %v109
    %v111 = vpop.f32.mrf.mxu0
    %112 = vdwg.mxu0
    %v113 = vmax.f32 %v110, 0.0
    %v114 = vld [vmem:[%s3] sm:$0xff]
    %v115 = vld [vmem:[%s3 + $0x8] sm:$0xff]
    %v116 = vld [vmem:[%s3 + $0x10] sm:$0xff]
    %v117 = vld [vmem:[%s3 + $0x18] sm:$0xff]
    %v118 = vld [vmem:[%s3 + $0x20] sm:$0xff]
    %v119 = vld [vmem:[%s3 + $0x28] sm:$0xff]
    %v120 = vld [vmem:[%s3 + $0x30] sm:$0xff]
    %v121 = vld [vmem:[%s3 + $0x38] sm:$0xff]
    %v122 = vld [vmem:[%s4] sm:$0x1]
    %v124 = vlaneseq
    %v125 = vshrl.u32 %v124, 7
    %v126 = vsub.s32 0, %v125
    %v127 = vrot.slane %v122, %v126
    %vm129 = vcmask 523264
    %v131 = vsel %vm129, %v113, 0
    %133 = vmatprep.subr.mxu0 0.0
    %134 = vmatpush1.msra.mxu0 0.0
    %135 = vmatprep.subr.mxu0 0.0
    %136 = vmatpush1.msra.mxu0 0.0
    %137 = vmatprep.subr.mxu0 0.0
    %138 = vmatpush1.msra.mxu0 0.0
    %139 = vmatprep.subr.mxu0 0.0
    %140 = vmatpush1.msra.mxu0 0.0
    %141 = vmatprep.subr.mxu0 0.0
    %142 = vmatpush1.msra.mxu0 0.0
    %143 = vmatprep.subr.mxu0 0.0
    %144 = vmatpush1.msra.mxu0 0.0
    %145 = vmatprep.subr.mxu0 0.0
    %146 = vmatpush1.msra.mxu0 0.0
    %147 = vmatprep.subr.mxu0 0.0
    %148 = vmatpush1.msra.mxu0 0.0
    %149 = vmatprep.subr.mxu0 0.0
    %150 = vmatpush1.msra.mxu0 %v121
    %151 = vmatprep.subr.mxu0 0.0
    %152 = vmatpush1.msra.mxu0 %v120
    %153 = vmatprep.subr.mxu0 0.0
    %154 = vmatpush1.msra.mxu0 %v119
    %155 = vmatprep.subr.mxu0 0.0
    %156 = vmatpush1.msra.mxu0 %v118
    %157 = vmatprep.subr.mxu0 0.0
    %158 = vmatpush1.msra.mxu0 %v117
    %159 = vmatprep.subr.mxu0 0.0
    %160 = vmatpush1.msra.mxu0 %v116
    %161 = vmatprep.subr.mxu0 0.0
    %162 = vmatpush1.msra.mxu0 %v115
    %163 = vmatprep.subr.mxu0 0.0
    %164 = vmatpush1.msra.mxu0 %v114
    %165 = vmatprep.subr.mxu0 0.0
    %166 = vmatpush2.msra.mxu0 0.0
    %167 = vmatprep.subr.mxu0 0.0
    %168 = vmatpush2.msra.mxu0 0.0
    %169 = vmatprep.subr.mxu0 0.0
    %170 = vmatpush2.msra.mxu0 0.0
    %171 = vmatprep.subr.mxu0 0.0
    %172 = vmatpush2.msra.mxu0 0.0
    %173 = vmatprep.subr.mxu0 0.0
    %174 = vmatpush2.msra.mxu0 0.0
    %175 = vmatprep.subr.mxu0 0.0
    %176 = vmatpush2.msra.mxu0 0.0
    %177 = vmatprep.subr.mxu0 0.0
    %178 = vmatpush2.msra.mxu0 0.0
    %179 = vmatprep.subr.mxu0 0.0
    %180 = vmatpush2.msra.mxu0 0.0
    %181 = vmatprep.subr.mxu0 0.0
    %182 = vmatpush2.msra.mxu0 0.0
    %183 = vmatprep.subr.mxu0 0.0
    %184 = vmatpush2.msra.mxu0 0.0
    %185 = vmatprep.subr.mxu0 0.0
    %186 = vmatpush2.msra.mxu0 0.0
    %187 = vmatprep.subr.mxu0 0.0
    %188 = vmatpush2.msra.mxu0 0.0
    %189 = vmatprep.subr.mxu0 0.0
    %190 = vmatpush2.msra.mxu0 0.0
    %191 = vmatprep.subr.mxu0 0.0
    %192 = vmatpush2.msra.mxu0 0.0
    %193 = vmatprep.subr.mxu0 0.0
    %194 = vmatpush2.msra.mxu0 0.0
    %195 = vmatprep.subr.mxu0 0.0
    %196 = vmatpush2.msra.mxu0 0.0
    %197 = vmatprep.mubr.f32.mxu0 0.0
    %198 = vmatmul.mubr.f32.gmra.mxu0 %v131
    %v199 = vpop.f32.mrf.mxu0
    %v200 = vadd.f32 %v127, %v199
    %v201 = vpop.f32.mrf.mxu0
    %202 = vdwg.mxu0
    %v203 = vmax.f32 %v200, 0.0
    %v204 = vld [vmem:[%s5] sm:$0xff]
    %v205 = vld [vmem:[%s5 + $0x8] sm:$0xff]
    %v206 = vld [vmem:[%s5 + $0x10] sm:$0xff]
    %v207 = vld [vmem:[%s5 + $0x18] sm:$0xff]
    %v208 = vld [vmem:[%s6] sm:$0x1]
    %v210 = vlaneseq
    %v211 = vshrl.u32 %v210, 7
    %v212 = vsub.s32 0, %v211
    %v213 = vrot.slane %v208, %v212
    %v216 = vsel %vm39, %v203, 0
    %218 = vmatprep.subr.mxu0 0.0
    %219 = vmatpush1.msra.mxu0 0.0
    %220 = vmatprep.subr.mxu0 0.0
    %221 = vmatpush1.msra.mxu0 0.0
    %222 = vmatprep.subr.mxu0 0.0
    %223 = vmatpush1.msra.mxu0 0.0
    %224 = vmatprep.subr.mxu0 0.0
    %225 = vmatpush1.msra.mxu0 0.0
    %226 = vmatprep.subr.mxu0 0.0
    %227 = vmatpush1.msra.mxu0 0.0
    %228 = vmatprep.subr.mxu0 0.0
    %229 = vmatpush1.msra.mxu0 0.0
    %230 = vmatprep.subr.mxu0 0.0
    %231 = vmatpush1.msra.mxu0 0.0
    %232 = vmatprep.subr.mxu0 0.0
    %233 = vmatpush1.msra.mxu0 0.0
    %234 = vmatprep.subr.mxu0 0.0
    %235 = vmatpush1.msra.mxu0 0.0
    %236 = vmatprep.subr.mxu0 0.0
    %237 = vmatpush1.msra.mxu0 0.0
    %238 = vmatprep.subr.mxu0 0.0
    %239 = vmatpush1.msra.mxu0 0.0
    %240 = vmatprep.subr.mxu0 0.0
    %241 = vmatpush1.msra.mxu0 0.0
    %242 = vmatprep.subr.mxu0 0.0
    %243 = vmatpush1.msra.mxu0 %v207
    %244 = vmatprep.subr.mxu0 0.0
    %245 = vmatpush1.msra.mxu0 %v206
    %246 = vmatprep.subr.mxu0 0.0
    %247 = vmatpush1.msra.mxu0 %v205
    %248 = vmatprep.subr.mxu0 0.0
    %249 = vmatpush1.msra.mxu0 %v204
    %250 = vmatprep.subr.mxu0 0.0
    %251 = vmatpush2.msra.mxu0 0.0
    %252 = vmatprep.subr.mxu0 0.0
    %253 = vmatpush2.msra.mxu0 0.0
    %254 = vmatprep.subr.mxu0 0.0
    %255 = vmatpush2.msra.mxu0 0.0
    %256 = vmatprep.subr.mxu0 0.0
    %257 = vmatpush2.msra.mxu0 0.0
    %258 = vmatprep.subr.mxu0 0.0
    %259 = vmatpush2.msra.mxu0 0.0
    %260 = vmatprep.subr.mxu0 0.0
    %261 = vmatpush2.msra.mxu0 0.0
    %262 = vmatprep.subr.mxu0 0.0
    %263 = vmatpush2.msra.mxu0 0.0
    %264 = vmatprep.subr.mxu0 0.0
    %265 = vmatpush2.msra.mxu0 0.0
    %266 = vmatprep.subr.mxu0 0.0
    %267 = vmatpush2.msra.mxu0 0.0
    %268 = vmatprep.subr.mxu0 0.0
    %269 = vmatpush2.msra.mxu0 0.0
    %270 = vmatprep.subr.mxu0 0.0
    %271 = vmatpush2.msra.mxu0 0.0
    %272 = vmatprep.subr.mxu0 0.0
    %273 = vmatpush2.msra.mxu0 0.0
    %274 = vmatprep.subr.mxu0 0.0
    %275 = vmatpush2.msra.mxu0 0.0
    %276 = vmatprep.subr.mxu0 0.0
    %277 = vmatpush2.msra.mxu0 0.0
    %278 = vmatprep.subr.mxu0 0.0
    %279 = vmatpush2.msra.mxu0 0.0
    %280 = vmatprep.subr.mxu0 0.0
    %281 = vmatpush2.msra.mxu0 0.0
    %282 = vmatprep.mubr.f32.mxu0 0.0
    %283 = vmatmul.mubr.f32.gmra.mxu0 %v216
    %v284 = vpop.f32.mrf.mxu0
    %v285 = vadd.f32 %v213, %v284
    %v286 = vpop.f32.mrf.mxu0
    %287 = vdwg.mxu0
    %v288 = vsub.f32 0.0, %v285
    %v289 = vmul.f32 %v288, 1.442695
    %v290 = vpow.pop %v289
    %v291 = vadd.f32 %v290, 1.0
    %v292 = vrcp.pop %v291
    %vm293 = vcmask 130048
    %294 = vst.msk [vmem:[#allocation2] sm:$0xff] %vm293, %v292
    // Predicated region
    $region30: #{tpu_custom_call.1} parent=1 // pred_check
      _
    $region31: #{tpu_custom_call.1} parent=1 // pred_check_branch
      %296 = sbr.rel (0) target = $region33
    $region32: #{tpu_custom_call.1} parent=1 // pred_region
      %s298 = ssub.s32 128, 128
      %299 = vsyncadd [#allocation3], %s298
      %s301 = sshll.u32 [#allocation2], 4
      %s302 = int_to_ptr.vmem [resolvable:$true] %s301
      %304 = dma.vmem_to_hbm [thread:$0]  %s302, 128, %s7, [#allocation3]
    $region33: #{tpu_custom_call.1} parent=1 // pred_fallthru
      _
    // Predicated region
    $region34: #{tpu_custom_call.1} parent=1 // pred_check
      _
    $region35: #{tpu_custom_call.1} parent=1 // pred_check_branch
      %306 = sbr.rel (0) target = $region37
    $region36: #{tpu_custom_call.1} parent=1 // pred_region
      %307 = dma.done [#allocation3], 128
    $region37: #{tpu_custom_call.1} parent=1 // pred_fallthru
      _
    %308 = vsyncpa [#allocation3], 1

</llo_original>
